<compile_context>
chip_gen: v7x
topology: tpu7x:2x2x1
jax: 0.10.0
libtpu: 0.0.40
codegen_flags: <defaults>
</compile_context>

<pallas_src>
import functools

import jax
import jax.numpy as jnp
from jax.experimental import pallas as pl
from jax.experimental.pallas import tpu as pltpu

EPS = 1e-5
# Tiles below are sized to stay far under v7x's 64 MiB physical VMEM; 32 MiB scoped is a
# valid cap on v5e / v6e / v7x.
_VMEM_LIMIT = 32 * 1024 * 1024


def _round_up(x, m):
    return (x + m - 1) // m * m


# ---------------------------------------------------------------------------
# K1: per-channel partial (sum, sum^2) over one tile of M rows.
# ---------------------------------------------------------------------------
def _stats_kernel(x_ref, pstats_ref):
    x = x_ref[...]                                      # [bm, C] (padded rows are zero)
    s = jnp.sum(x, axis=0, keepdims=True)               # [1, C]
    sq = jnp.sum(x * x, axis=0, keepdims=True)          # [1, C]
    pstats_ref[0] = jnp.concatenate([s, sq], axis=0)    # [2, C]


def _channel_stats(x2d, block_m):
    """Per-channel [sum; sum^2] of x2d ([M, C]) -> [2, C], tiled over M."""
    m, c = x2d.shape
    mp = _round_up(m, block_m)
    if mp != m:                                         # zero rows add 0 to sum / sum^2
        x2d = jnp.pad(x2d, ((0, mp - m), (0, 0)))
    nb = mp // block_m
    pstats = pl.pallas_call(
        _stats_kernel,
        out_shape=jax.ShapeDtypeStruct((nb, 2, c), jnp.float32),
        grid=(nb,),
        in_specs=[pl.BlockSpec((block_m, c), lambda i: (i, 0))],
        out_specs=pl.BlockSpec((1, 2, c), lambda i: (i, 0, 0)),
        compiler_params=pltpu.CompilerParams(
            dimension_semantics=("parallel",), vmem_limit_bytes=_VMEM_LIMIT),
    )(x2d)
    return jnp.sum(pstats, axis=0)                      # [2, C]


# ---------------------------------------------------------------------------
# K2: folded-BN1 + ReLU + 1x1 conv (MXU) + partial stats of y, fused per M tile.
# ---------------------------------------------------------------------------
def _bn_relu_conv_kernel(x_ref, sc_ref, sh_ref, w_ref, y_ref, pstats_ref, *,
                         m_true, block_m):
    i = pl.program_id(0)
    x = x_ref[...]                                                   # [bm, Cin]
    h = jnp.maximum(x * sc_ref[...] + sh_ref[...], 0.0)              # BN1 folded + ReLU
    y = jnp.dot(h, w_ref[...], preferred_element_type=jnp.float32)   # [bm, 64] (no bias)
    y_ref[...] = y
    # Partial stats of y.  Mask rows past the true M so padding never corrupts mean/var.
    row = i * block_m + jax.lax.broadcasted_iota(jnp.int32, (block_m, 1), 0)
    ym = jnp.where(row < m_true, y, 0.0)
    s = jnp.sum(ym, axis=0, keepdims=True)
    sq = jnp.sum(ym * ym, axis=0, keepdims=True)
    pstats_ref[0] = jnp.concatenate([s, sq], axis=0)


def _bn_relu_conv1x1(x2d, scale1, shift1, w1t, block_m):
    m, c = x2d.shape
    cout = w1t.shape[1]
    mp = _round_up(m, block_m)
    if mp != m:
        x2d = jnp.pad(x2d, ((0, mp - m), (0, 0)))
    nb = mp // block_m
    kern = functools.partial(_bn_relu_conv_kernel, m_true=m, block_m=block_m)
    y, pstats = pl.pallas_call(
        kern,
        out_shape=(jax.ShapeDtypeStruct((mp, cout), jnp.float32),
                   jax.ShapeDtypeStruct((nb, 2, cout), jnp.float32)),
        grid=(nb,),
        in_specs=[pl.BlockSpec((block_m, c), lambda i: (i, 0)),
                  pl.BlockSpec((1, c), lambda i: (0, 0)),
                  pl.BlockSpec((1, c), lambda i: (0, 0)),
                  pl.BlockSpec((c, cout), lambda i: (0, 0))],
        out_specs=(pl.BlockSpec((block_m, cout), lambda i: (i, 0)),
                   pl.BlockSpec((1, 2, cout), lambda i: (i, 0, 0))),
        compiler_params=pltpu.CompilerParams(
            dimension_semantics=("parallel",), vmem_limit_bytes=_VMEM_LIMIT),
    )(x2d, scale1.reshape(1, c), shift1.reshape(1, c), w1t)
    return y[:m], jnp.sum(pstats, axis=0)


# ---------------------------------------------------------------------------
# K3: folded-BN2 + 3x3 conv (padding=1) + bias, one image per grid step.
# ---------------------------------------------------------------------------
def _bn_conv3x3_kernel(y_ref, sc_ref, sh_ref, w_ref, b_ref, o_ref, *, H, W, C, G):
    z = y_ref[0] * sc_ref[...] + sh_ref[...]                  # [H, W, C], BN2 folded
    # zero padding=1 built directly in VMEM (no extra HBM pass).
    pad_r = jnp.zeros((1, W, C), jnp.float32)
    z = jnp.concatenate([pad_r, z, pad_r], axis=0)            # [H+2, W, C]
    pad_c = jnp.zeros((H + 2, 1, C), jnp.float32)
    z = jnp.concatenate([pad_c, z, pad_c], axis=1)            # [H+2, W+2, C]

    acc = jnp.zeros((H * W, G), jnp.float32)
    for dj in range(3):                                       # 9 taps, statically unrolled
        zj = z[:, dj:dj + W, :].reshape((H + 2) * W, C)
        for di in range(3):
            patch = zj[di * W:(di + H) * W, :]                # [H*W, C]
            acc = acc + jnp.dot(patch, w_ref[di * 3 + dj],
                                preferred_element_type=jnp.float32)
    o_ref[0] = (acc + b_ref[...]).reshape(H, W, G)


def _bn_conv3x3(y4, scale2, shift2, w3t, bias3):
    n, h, w, c = y4.shape
    g = w3t.shape[-1]
    kern = functools.partial(_bn_conv3x3_kernel, H=h, W=w, C=c, G=g)
    # TODO(synk): for very large H*W planes, tile H with 1-row halos instead of whole images.
    return pl.pallas_call(
        kern,
        out_shape=jax.ShapeDtypeStruct((n, h, w, g), jnp.float32),
        grid=(n,),
        in_specs=[pl.BlockSpec((1, h, w, c), lambda i: (i, 0, 0, 0)),
                  pl.BlockSpec((1, 1, c), lambda i: (0, 0, 0)),
                  pl.BlockSpec((1, 1, c), lambda i: (0, 0, 0)),
                  pl.BlockSpec((9, c, g), lambda i: (0, 0, 0)),
                  pl.BlockSpec((1, g), lambda i: (0, 0))],
        out_specs=pl.BlockSpec((1, h, w, g), lambda i: (i, 0, 0, 0)),
        compiler_params=pltpu.CompilerParams(
            dimension_semantics=("parallel",), vmem_limit_bytes=_VMEM_LIMIT),
    )(y4, scale2.reshape(1, 1, c), shift2.reshape(1, 1, c), w3t, bias3.reshape(1, g))


# ---------------------------------------------------------------------------
# Host-side glue (tiny per-channel math + layer loop).
# ---------------------------------------------------------------------------
def _fold_bn(stats, m, gamma, beta, eps=EPS):
    """Fold training-mode BN into one per-channel FMA: x * scale + shift."""
    mean = stats[0] / m
    var = stats[1] / m - mean * mean                    # biased variance
    scale = gamma * jax.lax.rsqrt(var + eps)
    shift = beta - mean * scale
    return scale, shift


def bottleneck_forward(x_nchw, layer_params, block_m=512):
    """Pallas forward of Bottleneck (= DenseBlcok); NCHW in, NCHW out."""
    n, c0, h, w = x_nchw.shape
    m = n * h * w
    bm = min(block_m, _round_up(m, 8))

    # NCHW -> channels-last [M, C] exactly once for the whole block.
    x2d = jnp.transpose(x_nchw, (0, 2, 3, 1)).reshape(m, c0).astype(jnp.float32)

    # Running per-channel (sum, sum^2): already-concatenated channels never change, so
    # their stats are carried forward instead of re-reading x each layer.
    stats_all = _channel_stats(x2d, bm)                             # [2, C]

    for li, p in enumerate(layer_params):
        scale1, shift1 = _fold_bn(stats_all, m, p["g1"], p["b1"])
        y2d, y_stats = _bn_relu_conv1x1(x2d, scale1, shift1, p["w1t"], bm)
        scale2, shift2 = _fold_bn(y_stats, m, p["g2"], p["b2"])

        cmid = p["w1t"].shape[1]
        g = p["w3t"].shape[-1]
        y4 = y2d.reshape(n, h, w, cmid)
        out2d = _bn_conv3x3(y4, scale2, shift2, p["w3t"], p["bias3"]).reshape(m, g)

        x2d = jnp.concatenate([x2d, out2d], axis=-1)                # dense concat
        if li + 1 < len(layer_params):
            stats_all = jnp.concatenate(
                [stats_all, _channel_stats(out2d, bm)], axis=-1)

    cf = x2d.shape[1]
    return x2d.reshape(n, h, w, cf).transpose(0, 3, 1, 2).astype(x_nchw.dtype)


# ---------------------------------------------------------------------------
# Pure-JAX reference (same math as the PyTorch Bottleneck forward, training mode).
# ---------------------------------------------------------------------------
def _bn_train_ref(x, gamma, beta, eps=EPS):
    mean = jnp.mean(x, axis=(0, 2, 3), keepdims=True)
    var = jnp.mean((x - mean) ** 2, axis=(0, 2, 3), keepdims=True)
    xhat = (x - mean) / jnp.sqrt(var + eps)
    return gamma.reshape(1, -1, 1, 1) * xhat + beta.reshape(1, -1, 1, 1)


def bottleneck_ref(x_nchw, layer_params):
    x = x_nchw.astype(jnp.float32)
    for p in layer_params:
        h = jnp.maximum(_bn_train_ref(x, p["g1"], p["b1"]), 0.0)
        y = jnp.einsum("nchw,oc->nohw", h, p["w1"]) + p["bias1"].reshape(1, -1, 1, 1)
        z = _bn_train_ref(y, p["g2"], p["b2"])
        out = jax.lax.conv_general_dilated(
            z, p["w3"], window_strides=(1, 1), padding=((1, 1), (1, 1)),
            dimension_numbers=("NCHW", "OIHW", "NCHW"))
        out = out + p["bias3"].reshape(1, -1, 1, 1)
        x = jnp.concatenate([x, out], axis=1)
    return x.astype(x_nchw.dtype)


if __name__ == "__main__":
    key = jax.random.PRNGKey(0)
    N, C0, H, W = 2, 4, 16, 16
    growth_rate, n_layers = 8, 2

    keys = jax.random.split(key, 1 + 4 * n_layers)
    x = jax.random.normal(keys[0], (N, C0, H, W), dtype=jnp.float32)

    layer_params = []
    cin = C0
    ki = 1
    for _ in range(n_layers):
        bnd1 = 1.0 / (cin ** 0.5)                 # Conv2d(cin, 64, 1) init bound
        w1 = jax.random.uniform(keys[ki], (64, cin), minval=-bnd1, maxval=bnd1,
                                dtype=jnp.float32); ki += 1
        bias1 = jax.random.uniform(keys[ki], (64,), minval=-bnd1, maxval=bnd1,
                                   dtype=jnp.float32); ki += 1
        bnd3 = 1.0 / ((64 * 9) ** 0.5)            # Conv2d(64, G, 3) init bound
        w3 = jax.random.uniform(keys[ki], (growth_rate, 64, 3, 3), minval=-bnd3,
                                maxval=bnd3, dtype=jnp.float32); ki += 1
        bias3 = jax.random.uniform(keys[ki], (growth_rate,), minval=-bnd3, maxval=bnd3,
                                   dtype=jnp.float32); ki += 1
        layer_params.append({
            # BatchNorm2d defaults: weight=1, bias=0 (training mode -> batch statistics).
            "g1": jnp.ones((cin,), jnp.float32), "b1": jnp.zeros((cin,), jnp.float32),
            "g2": jnp.ones((64,), jnp.float32), "b2": jnp.zeros((64,), jnp.float32),
            "w1": w1, "bias1": bias1, "w3": w3, "bias3": bias3,
            # Kernel-friendly layouts, prepared once (Cout on the lane axis).
            "w1t": w1.T,                                                     # [cin, 64]
            "w3t": jnp.transpose(w3, (2, 3, 1, 0)).reshape(9, 64, growth_rate),
        })
        cin += growth_rate

    out = bottleneck_forward(x, layer_params, block_m=128)   # 128-row tiles -> 4-step grid
    out = jax.block_until_ready(out)

    ref = bottleneck_ref(x, layer_params)
    assert out.shape == (N, C0 + n_layers * growth_rate, H, W), out.shape
    max_err = float(jnp.max(jnp.abs(out - ref)))
    assert jnp.allclose(out, ref, atol=1e-3, rtol=1e-3), f"mismatch vs reference: {max_err}"
    print("KERNEL_OK")
</pallas_src>

<mosaic_0001>
module attributes {stable_mosaic.version = 11 : i64} {
  func.func @_stats_kernel(%arg0: i32, %arg1: memref<128x4xf32, #tpu.memory_space<vmem>>, %arg2: memref<1x2x4xf32, #tpu.memory_space<vmem>>) attributes {dimension_semantics = [#tpu.dimension_semantics<parallel>], iteration_bounds = array<i64: 4>, scalar_prefetch = 0 : i64, scratch_operands = 0 : i64, tpu.core_type = #tpu.core_type<tc>, window_params = [{transform_indices = @transform_0, window_bounds = array<i64: 128, 4>}, {transform_indices = @transform_1, window_bounds = array<i64: 1, 2, 4>}]} {
    %c0 = arith.constant 0 : index
    %c0_0 = arith.constant 0 : index
    %0 = vector.load %arg1[%c0, %c0_0] : memref<128x4xf32, #tpu.memory_space<vmem>>, vector<128x4xf32>
    %cst = arith.constant dense<0.000000e+00> : vector<4xf32>
    %1 = vector.multi_reduction <add>, %0, %cst [0] : vector<128x4xf32> to vector<4xf32>
    %2 = vector.shape_cast %1 : vector<4xf32> to vector<1x4xf32>
    %3 = arith.mulf %0, %0 : vector<128x4xf32>
    %cst_1 = arith.constant dense<0.000000e+00> : vector<4xf32>
    %4 = vector.multi_reduction <add>, %3, %cst_1 [0] : vector<128x4xf32> to vector<4xf32>
    %5 = vector.shape_cast %4 : vector<4xf32> to vector<1x4xf32>
    %6 = tpu.concatenate %2, %5 in 0 : vector<1x4xf32>, vector<1x4xf32> -> vector<2x4xf32>
    %c0_2 = arith.constant 0 : index
    %c0_3 = arith.constant 0 : index
    %c0_4 = arith.constant 0 : index
    %7 = vector.load %arg2[%c0_2, %c0_3, %c0_4] : memref<1x2x4xf32, #tpu.memory_space<vmem>>, vector<1x2x4xf32>
    %8 = vector.shape_cast %7 : vector<1x2x4xf32> to vector<2x4xf32>
    %9 = vector.shape_cast %6 : vector<2x4xf32> to vector<1x2x4xf32>
    tpu.vector_store %arg2[%c0_2, %c0_3, %c0_4], %9 {strides = array<i32>} : memref<1x2x4xf32, #tpu.memory_space<vmem>>, vector<1x2x4xf32>,
    return
  }
  func.func @transform_0(%arg0: i32) -> (i32, i32) {
    %c0_i32 = arith.constant 0 : i32
    %c0_i32_0 = arith.constant 0 : i32
    return %arg0, %c0_i32 : i32, i32
  }
  func.func @transform_1(%arg0: i32) -> (i32, i32, i32) {
    %c0_i32 = arith.constant 0 : i32
    %c0_i32_0 = arith.constant 0 : i32
    %c0_i32_1 = arith.constant 0 : i32
    return %arg0, %c0_i32, %c0_i32_0 : i32, i32, i32
  }
}

</mosaic_0001>

<llo_original>
// kernel: tpu_custom_call.1
$region0: #{tpu_custom_call.1}
  #allocation0 [shape = 'u32[]', space=smem, size = 0x4, offset = 0x4, fixed_abs, tag = 'smem constant byte address 0x4 - core index']
  #allocation1 [shape = 'u32[144,128]{1,0:T(1,128)}', space=vmem, size = 0x12000, scoped, tag = 'internal scratch']
  %s0 = inlined_call_operand.vmem [shape: f32[512,4], index: 0, kind: input, shape index: {}]
  %s1 = inlined_call_operand.hbm [shape: f32[4,2,4], index: 1, kind: output, shape index: {}]
  %s2 = sld [smem:[#allocation0]]
  $region37: #{tpu_custom_call.1} parent=0
    _
  %s4 = ssub.s32 1, %s2
  %s5 = scalar_select 0, %s4, %s2
  $region1: #{tpu_custom_call.1} parent=0
    #allocation2 [shape = 'u8[2048]{0}', space=vmem, size = 0x800, scoped, tag = 'output window, operand 0']
    #allocation3 [shape = 's32[2]{0}', space=sflag, size = 0x8, scoped, tag = 'scoped memory for tpu_custom_call.1']
    %6 = vsyncpa [#allocation3], 0
    %s7 = scalar_lea.sflag [#allocation3], 1
    %8 = vsyncpa %s7, 0
    loop: start=0, step=1, limit=6
    $region2: #{tpu_custom_call.1} parent=1 // loop_pre_header
      _
    $region3: #{tpu_custom_call.1} parent=1 // loop_header
      %s10 = sphi 0, %s14
      %p11 = scmp.ge.s32.totalorder %s10, 6
      %s20 = sphi 0, %s22
      %s23 = sphi 0, %s20
      %s24 = sphi 0, %s23
      %s40 = sphi 0, %s24
      %s46 = sphi 0, %s48
      %s49 = sphi 0, %s46
      %s50 = sphi 0, %s49
      %s66 = sphi 0, %s50
    $region4: #{tpu_custom_call.1} parent=1 // loop_header_branch
      %13 = sbr.rel (%p11) target = $region8
    $region5: #{tpu_custom_call.1} parent=1 // loop_body
      %s15 = ssub.s32 %s10, 1
      %s16 = ssub.s32 %s10, 2
      %s17 = sadd.s32 %s10, 1
      %s18 = ssub.s32 %s10, %s17
      %p19 = scmp.eq.s32.totalorder %s18, 0
      %s21 = sadd.s32 %s20, 1
      %s22 = scalar_select %p19, %s20, %s21
      %p25 = pneg %p19
      %p26 = scmp.eq.s32.totalorder %s10, 3
      %p27 = por %p25, %p26
      %p28 = scmp.ne.s32.totalorder %s20, %s23
      %p29 = scmp.eq.s32.totalorder %s10, 0
      %p30 = por %p28, %p29
      %p31 = scmp.ne.s32.totalorder %s20, %s23
      %p32 = scmp.eq.s32.totalorder %s15, 3
      %p33 = por %p31, %p32
      %p34 = scmp.ne.s32.totalorder %s23, %s24
      %p35 = scmp.eq.s32.totalorder %s15, 0
      %p36 = por %p34, %p35
      %p37 = scmp.ne.s32.totalorder %s23, %s24
      %p38 = scmp.eq.s32.totalorder %s16, 3
      %p39 = por %p37, %p38
      %p41 = scmp.ne.s32.totalorder %s24, %s40
      %p42 = scmp.eq.s32.totalorder %s16, 0
      %p43 = por %p41, %p42
      %s44 = ssub.s32 %s10, %s17
      %p45 = scmp.eq.s32.totalorder %s44, 0
      %s47 = sadd.s32 %s46, 1
      %s48 = scalar_select %p45, %s46, %s47
      %p51 = pneg %p45
      %p52 = scmp.eq.s32.totalorder %s10, 3
      %p53 = por %p51, %p52
      %p54 = scmp.ne.s32.totalorder %s46, %s49
      %p55 = scmp.eq.s32.totalorder %s10, 0
      %p56 = por %p54, %p55
      %p57 = scmp.ne.s32.totalorder %s46, %s49
      %p58 = scmp.eq.s32.totalorder %s15, 3
      %p59 = por %p57, %p58
      %p60 = scmp.ne.s32.totalorder %s49, %s50
      %p61 = scmp.eq.s32.totalorder %s15, 0
      %p62 = por %p60, %p61
      %p63 = scmp.ne.s32.totalorder %s49, %s50
      %p64 = scmp.eq.s32.totalorder %s16, 3
      %p65 = por %p63, %p64
      %p67 = scmp.ne.s32.totalorder %s50, %s66
      %p68 = scmp.eq.s32.totalorder %s16, 0
      %p69 = por %p67, %p68
      %p70 = scmp.le.s32.totalorder 1, %s10
      %p71 = scmp.lt.s32.totalorder %s10, 5
      %p72 = pnand %p70, %p71
      %p73 = pneg %p72
      // Predicated region
      $region9: #{tpu_custom_call.1} parent=5 // pred_check
        _
      $region10: #{tpu_custom_call.1} parent=5 // pred_check_branch
        %75 = sbr.rel (%p72) target = $region12
      $region11: #{tpu_custom_call.1} parent=5 // pred_region
        %s76 = ssub.s32 %s10, 1
      $region12: #{tpu_custom_call.1} parent=5 // pred_fallthru
        _
      %p77 = scmp.lt.s32.totalorder %s10, 4
      // Predicated region
      $region13: #{tpu_custom_call.1} parent=5 // pred_check
        %p78 = pneg %p77
      $region14: #{tpu_custom_call.1} parent=5 // pred_check_branch
        %80 = sbr.rel (%p78) target = $region16
      $region15: #{tpu_custom_call.1} parent=5 // pred_region
        // Predicated region
        $region17: #{tpu_custom_call.1} parent=15 // pred_check
          %p81 = pneg %p30
        $region18: #{tpu_custom_call.1} parent=15 // pred_check_branch
          %83 = sbr.rel (%p81) target = $region20
        $region19: #{tpu_custom_call.1} parent=15 // pred_region
          %s84 = smul.u32 16, %s10
          %p85 = scmp.lt.s32.totalorder %s84, 63
          %s86 = scalar_select %p85, %s84, 63
          %s87 = smul.addr %s86, 8
          %s88 = scalar_lea.vmem %s0, %s87
          %s89 = smul.u32 16, %s10
        $region20: #{tpu_custom_call.1} parent=15 // pred_fallthru
          _
      $region16: #{tpu_custom_call.1} parent=5 // pred_fallthru
        _
      %p90 = scmp.le.s32.totalorder 1, %s10
      %p91 = scmp.lt.s32.totalorder %s10, 5
      %p92 = pnand %p90, %p91
      %p93 = pneg %p92
      // Predicated region
      $region21: #{tpu_custom_call.1} parent=5 // pred_check
        _
      $region22: #{tpu_custom_call.1} parent=5 // pred_check_branch
        %95 = sbr.rel (%p92) target = $region24
      $region23: #{tpu_custom_call.1} parent=5 // pred_region
        %s96 = ssub.s32 %s10, 1
        %s97 = smul.u32 16, %s15
        %p98 = scmp.lt.s32.totalorder %s97, 63
        %s99 = scalar_select %p98, %s97, 63
        %s100 = smul.addr %s99, 8
        %s101 = scalar_lea.vmem %s0, %s100
        %p102 = pneg %p36
        %p103 = pneg %p33
        %p104 = pneg %p62
        %p105 = pneg %p59
        %s106 = sand.u32 %s49, 1
        %s107 = scalar_lea.sflag [#allocation3], %s106
        %s108 = sand.u32 %s49, 1
        %s109 = smul.addr %s108, 2
        %s110 = scalar_lea.vmem [#allocation2], %s109
        %s111 = smul.u32 16, %s15
        %p112 = scmp.lt.s32.totalorder %s111, 63
        %s113 = scalar_select %p112, %s111, 63
        %s114 = smul.addr %s113, 8
        %s115 = scalar_lea.vmem %s0, %s114
        %s116 = smul.u32 16, %s15
        %v117 = vld [vmem:[%s115] sm:$0xff]
        %v118 = vld [vmem:[%s115 + $0x8] sm:$0xff]
        %v119 = vld [vmem:[%s115 + $0x10] sm:$0xff]
        %v120 = vld [vmem:[%s115 + $0x18] sm:$0xff]
        %v121 = vld [vmem:[%s115 + $0x20] sm:$0xff]
        %v122 = vld [vmem:[%s115 + $0x28] sm:$0xff]
        %v123 = vld [vmem:[%s115 + $0x30] sm:$0xff]
        %v124 = vld [vmem:[%s115 + $0x38] sm:$0xff]
        %v125 = vld [vmem:[%s115 + $0x40] sm:$0xff]
        %v126 = vld [vmem:[%s115 + $0x48] sm:$0xff]
        %v127 = vld [vmem:[%s115 + $0x50] sm:$0xff]
        %v128 = vld [vmem:[%s115 + $0x58] sm:$0xff]
        %v129 = vld [vmem:[%s115 + $0x60] sm:$0xff]
        %v130 = vld [vmem:[%s115 + $0x68] sm:$0xff]
        %v131 = vld [vmem:[%s115 + $0x70] sm:$0xff]
        %v132 = vld [vmem:[%s115 + $0x78] sm:$0xff]
        %vm133 = vcmask 31744
        %v134 = vsel %vm133, %v117, 0.0
        %v135 = vsel %vm133, %v118, 0.0
        %v136 = vadd.f32 %v134, %v135
        %v137 = vsel %vm133, %v119, 0.0
        %v138 = vadd.f32 %v136, %v137
        %v139 = vsel %vm133, %v120, 0.0
        %v140 = vadd.f32 %v138, %v139
        %v141 = vsel %vm133, %v121, 0.0
        %v142 = vadd.f32 %v140, %v141
        %v143 = vsel %vm133, %v122, 0.0
        %v144 = vadd.f32 %v142, %v143
        %v145 = vsel %vm133, %v123, 0.0
        %v146 = vadd.f32 %v144, %v145
        %v147 = vsel %vm133, %v124, 0.0
        %v148 = vadd.f32 %v146, %v147
        %v149 = vsel %vm133, %v125, 0.0
        %v150 = vadd.f32 %v148, %v149
        %v151 = vsel %vm133, %v126, 0.0
        %v152 = vadd.f32 %v150, %v151
        %v153 = vsel %vm133, %v127, 0.0
        %v154 = vadd.f32 %v152, %v153
        %v155 = vsel %vm133, %v128, 0.0
        %v156 = vadd.f32 %v154, %v155
        %v157 = vsel %vm133, %v129, 0.0
        %v158 = vadd.f32 %v156, %v157
        %v159 = vsel %vm133, %v130, 0.0
        %v160 = vadd.f32 %v158, %v159
        %v161 = vsel %vm133, %v131, 0.0
        %v162 = vadd.f32 %v160, %v161
        %v163 = vsel %vm133, %v132, 0.0
        %v164 = vadd.f32 %v162, %v163
        %v165 = vrot.slane %v164, 4
        %v166 = vadd.f32 %v164, %v165
        %v167 = vrot.slane %v166, 2
        %v168 = vadd.f32 %v166, %v167
        %v169 = vrot.slane %v168, 1
        %v170 = vadd.f32 %v168, %v169
        %v171 = vmul.f32 %v117, %v117
        %v172 = vmul.f32 %v118, %v118
        %v173 = vmul.f32 %v119, %v119
        %v174 = vmul.f32 %v120, %v120
        %v175 = vmul.f32 %v121, %v121
        %v176 = vmul.f32 %v122, %v122
        %v177 = vmul.f32 %v123, %v123
        %v178 = vmul.f32 %v124, %v124
        %v179 = vmul.f32 %v125, %v125
        %v180 = vmul.f32 %v126, %v126
        %v181 = vmul.f32 %v127, %v127
        %v182 = vmul.f32 %v128, %v128
        %v183 = vmul.f32 %v129, %v129
        %v184 = vmul.f32 %v130, %v130
        %v185 = vmul.f32 %v131, %v131
        %v186 = vmul.f32 %v132, %v132
        %v187 = vsel %vm133, %v171, 0.0
        %v188 = vsel %vm133, %v172, 0.0
        %v189 = vadd.f32 %v187, %v188
        %v190 = vsel %vm133, %v173, 0.0
        %v191 = vadd.f32 %v189, %v190
        %v192 = vsel %vm133, %v174, 0.0
        %v193 = vadd.f32 %v191, %v192
        %v194 = vsel %vm133, %v175, 0.0
        %v195 = vadd.f32 %v193, %v194
        %v196 = vsel %vm133, %v176, 0.0
        %v197 = vadd.f32 %v195, %v196
        %v198 = vsel %vm133, %v177, 0.0
        %v199 = vadd.f32 %v197, %v198
        %v200 = vsel %vm133, %v178, 0.0
        %v201 = vadd.f32 %v199, %v200
        %v202 = vsel %vm133, %v179, 0.0
        %v203 = vadd.f32 %v201, %v202
        %v204 = vsel %vm133, %v180, 0.0
        %v205 = vadd.f32 %v203, %v204
        %v206 = vsel %vm133, %v181, 0.0
        %v207 = vadd.f32 %v205, %v206
        %v208 = vsel %vm133, %v182, 0.0
        %v209 = vadd.f32 %v207, %v208
        %v210 = vsel %vm133, %v183, 0.0
        %v211 = vadd.f32 %v209, %v210
        %v212 = vsel %vm133, %v184, 0.0
        %v213 = vadd.f32 %v211, %v212
        %v214 = vsel %vm133, %v185, 0.0
        %v215 = vadd.f32 %v213, %v214
        %v216 = vsel %vm133, %v186, 0.0
        %v217 = vadd.f32 %v215, %v216
        %v218 = vrot.slane %v217, 4
        %v219 = vadd.f32 %v217, %v218
        %v220 = vrot.slane %v219, 2
        %v221 = vadd.f32 %v219, %v220
        %v222 = vrot.slane %v221, 1
        %v223 = vadd.f32 %v221, %v222
        %vm224 = vcmask 1040384
        %v225 = vsel %vm224, %v170, %v223
        %vm226 = vcmask 25600
        %227 = vst.msk [vmem:[%s110] sm:$0x3] %vm226, %v225
        %s228 = sand.u32 %s49, 1
        %s229 = scalar_lea.sflag [#allocation3], %s228
        %s230 = sand.u32 %s49, 1
        %s231 = smul.addr %s230, 2
        %s232 = scalar_lea.vmem [#allocation2], %s231
        // Predicated region
        $region25: #{tpu_custom_call.1} parent=23 // pred_check
          %p233 = pneg %p59
        $region26: #{tpu_custom_call.1} parent=23 // pred_check_branch
          %235 = sbr.rel (%p233) target = $region28
        $region27: #{tpu_custom_call.1} parent=23 // pred_region
          %s237 = ssub.s32 32, 32
          %238 = vsyncadd %s229, %s237
          %s239 = smul.addr %s15, 32
          %s240 = scalar_lea.hbm %s1, %s239
          %s242 = sshll.u32 %s232, 4
          %s243 = int_to_ptr.vmem [resolvable:$true] %s242
          %245 = dma.vmem_to_hbm [thread:$0]  %s243, 32, %s240, %s229
        $region28: #{tpu_custom_call.1} parent=23 // pred_fallthru
          _
      $region24: #{tpu_custom_call.1} parent=5 // pred_fallthru
        _
      %p246 = scmp.le.s32.totalorder 2, %s10
      // Predicated region
      $region29: #{tpu_custom_call.1} parent=5 // pred_check
        %p247 = pneg %p246
      $region30: #{tpu_custom_call.1} parent=5 // pred_check_branch
        %249 = sbr.rel (%p247) target = $region32
      $region31: #{tpu_custom_call.1} parent=5 // pred_region
        %s250 = ssub.s32 %s10, 2
        // Predicated region
        $region33: #{tpu_custom_call.1} parent=31 // pred_check
          %p251 = pneg %p65
        $region34: #{tpu_custom_call.1} parent=31 // pred_check_branch
          %253 = sbr.rel (%p251) target = $region36
        $region35: #{tpu_custom_call.1} parent=31 // pred_region
          %s254 = sand.u32 %s50, 1
          %s255 = scalar_lea.sflag [#allocation3], %s254
          %s256 = sand.u32 %s50, 1
          %s257 = smul.addr %s256, 2
          %s258 = scalar_lea.vmem [#allocation2], %s257
          %259 = dma.done %s255, 32
        $region36: #{tpu_custom_call.1} parent=31 // pred_fallthru
          _
      $region32: #{tpu_custom_call.1} parent=5 // pred_fallthru
        _
    $region6: #{tpu_custom_call.1} parent=1 // loop_footer
      %s14 = sadd.s32 1, %s10
    $region7: #{tpu_custom_call.1} parent=1 // loop_footer_branch
      %9 = sbr.rel target = $region3
    $region8: #{tpu_custom_call.1} parent=1 // loop_exit
      _
    %260 = vsyncpa [#allocation3], 1
    %s261 = scalar_lea.sflag [#allocation3], 1
    %262 = vsyncpa %s261, 1

</llo_original>
